<compile_context>
chip_gen: v5e
topology: v5e:2x2
jax: 0.10.0
libtpu: 0.0.40
codegen_flags: <defaults>
</compile_context>

<pallas_src>
import jax
import jax.numpy as jnp
from jax.experimental import pallas as pl
from jax.experimental.pallas import tpu as pltpu


def _logistic_nn_kernel(zcs_ref, o_ref):
    # zcs_ref: (3, D) float32 in VMEM -- rows are [z, centers, scalings].
    # o_ref:   (D, D) float32 in VMEM -- the module output diag(z_).
    z = zcs_ref[0:1, :]                       # (1, D)
    c = zcs_ref[1:2, :]
    s = zcs_ref[2:3, :]
    z_scaled = (z - c) * s
    z_sq = z_scaled * z_scaled
    z_ = z_sq * (1.0 - z_sq)                  # (1, D)

    d = o_ref.shape[0]
    rows = jax.lax.broadcasted_iota(jnp.int32, (d, d), 0)
    cols = jax.lax.broadcasted_iota(jnp.int32, (d, d), 1)
    # out[i, j] = z_[j] if i == j else 0  ->  diag(z_)
    o_ref[...] = jnp.where(rows == cols, z_, jnp.float32(0.0))


def logistic_nn_forward(z, centers, scalings):
    """Pallas implementation of logistic_nn.forward for a 1-D input z of length D."""
    d = z.shape[-1]
    # Single fused (3, D) input: one DMA instead of three tiny padded ones.
    zcs = jnp.stack(
        [z.reshape(d), centers.reshape(d), scalings.reshape(d)], axis=0
    ).astype(jnp.float32)                                    # (3, D)

    vmem = pltpu.MemorySpace.VMEM
    return pl.pallas_call(
        _logistic_nn_kernel,
        out_shape=jax.ShapeDtypeStruct((d, d), jnp.float32),
        in_specs=[pl.BlockSpec(memory_space=vmem)],          # whole array, no grid
        out_specs=pl.BlockSpec(memory_space=vmem),
    )(zcs)


def logistic_nn_reference(z, centers, scalings):
    """Plain-JAX reference matching the PyTorch module semantics."""
    d = z.shape[-1]
    z_scaled = (z - centers) * scalings
    z_ = jnp.power(z_scaled, 2) * (1.0 - jnp.power(z_scaled, 2))
    return z_ * jnp.eye(d, dtype=jnp.float32)


if __name__ == "__main__":
    D = 32  # "dimension" of the logistic_nn module

    key = jax.random.PRNGKey(0)
    kz, kc, ks = jax.random.split(key, 3)

    # Deterministic synthetic parameters (module __init__ takes numpy arrays
    # of shape (dimension,) for centers and scalings).
    z = jax.random.normal(kz, (D,), dtype=jnp.float32)
    centers = jax.random.normal(kc, (D,), dtype=jnp.float32)
    scalings = 0.5 + jax.random.uniform(ks, (D,), dtype=jnp.float32)

    fwd = jax.jit(logistic_nn_forward)
    out = jax.block_until_ready(fwd(z, centers, scalings))

    ref = logistic_nn_reference(z, centers, scalings)
    assert out.shape == (D, D)
    assert jnp.allclose(out, ref, atol=1e-5, rtol=1e-5), "mismatch vs reference"

    print("KERNEL_OK")
</pallas_src>

<mosaic_0001>
module attributes {stable_mosaic.version = 11 : i64} {
  func.func @_logistic_nn_kernel(%arg0: memref<3x32xf32, #tpu.memory_space<vmem>>, %arg1: memref<32x32xf32, #tpu.memory_space<vmem>>) attributes {dimension_semantics = [], scalar_prefetch = 0 : i64, scratch_operands = 0 : i64, tpu.core_type = #tpu.core_type<tc>} {
    %c0 = arith.constant 0 : index
    %c0_0 = arith.constant 0 : index
    %0 = vector.load %arg0[%c0, %c0_0] : memref<3x32xf32, #tpu.memory_space<vmem>>, vector<1x32xf32>
    %c1 = arith.constant 1 : index
    %c0_1 = arith.constant 0 : index
    %1 = vector.load %arg0[%c1, %c0_1] : memref<3x32xf32, #tpu.memory_space<vmem>>, vector<1x32xf32>
    %c2 = arith.constant 2 : index
    %c0_2 = arith.constant 0 : index
    %2 = vector.load %arg0[%c2, %c0_2] : memref<3x32xf32, #tpu.memory_space<vmem>>, vector<1x32xf32>
    %3 = arith.subf %0, %1 : vector<1x32xf32>
    %4 = arith.mulf %3, %2 : vector<1x32xf32>
    %5 = arith.mulf %4, %4 : vector<1x32xf32>
    %cst = arith.constant 1.000000e+00 : f32
    %6 = vector.broadcast %cst : f32 to vector<1x32xf32>
    %7 = arith.subf %6, %5 : vector<1x32xf32>
    %8 = arith.mulf %5, %7 : vector<1x32xf32>
    %9 = tpu.iota {dimensions = array<i32: 0>} : vector<32x32xi32>
    %10 = tpu.iota {dimensions = array<i32: 1>} : vector<32x32xi32>
    %11 = arith.cmpi eq, %9, %10 : vector<32x32xi32>
    %cst_3 = arith.constant 0.000000e+00 : f32
    %12 = vector.shape_cast %8 : vector<1x32xf32> to vector<1x32xf32>
    %13 = vector.broadcast %12 : vector<1x32xf32> to vector<32x32xf32>
    %14 = vector.broadcast %cst_3 : f32 to vector<32x32xf32>
    %15 = arith.select %11, %13, %14 : vector<32x32xi1>, vector<32x32xf32>
    %c0_4 = arith.constant 0 : index
    %c0_5 = arith.constant 0 : index
    %16 = vector.load %arg1[%c0_4, %c0_5] : memref<32x32xf32, #tpu.memory_space<vmem>>, vector<32x32xf32>
    tpu.vector_store %arg1[%c0_4, %c0_5], %15 {strides = array<i32>} : memref<32x32xf32, #tpu.memory_space<vmem>>, vector<32x32xf32>,
    return
  }
}

</mosaic_0001>

<llo_original>
// kernel: logistic_nn_forward.1
$region0: #{logistic_nn_forward.1}
  #allocation0 [shape = 'u32[]', space=smem, size = 0x4, offset = 0x4, fixed_abs, tag = 'smem constant byte address 0x4 - core index']
  #allocation1 [shape = 'u32[72,128]{1,0:T(1,128)}', space=vmem, size = 0x9000, scoped, tag = 'internal scratch']
  %s0 = inlined_call_operand.vmem [shape: f32[3,32], index: 0, kind: input, shape index: {}]
  %s1 = inlined_call_operand.hbm [shape: f32[32,32], index: 1, kind: output, shape index: {}]
  %s2 = sld [smem:[#allocation0]]
  $region14: #{logistic_nn_forward.1} parent=0
    _
  %s4 = ssub.s32 1, %s2
  %s5 = scalar_select 0, %s4, %s2
  $region1: #{logistic_nn_forward.1} parent=0
    #allocation2 [shape = 'u8[16384]{0}', space=vmem, size = 0x4000, scoped, tag = 'output window, operand 0, single buffered']
    #allocation3 [shape = 's32[1]{0}', space=sflag, size = 0x4, scoped, tag = 'scoped memory for logistic_nn_forward.1']
    %6 = vsyncpa [#allocation3], 0
    // Predicated region
    $region2: #{logistic_nn_forward.1} parent=1 // pred_check
      _
    $region3: #{logistic_nn_forward.1} parent=1 // pred_check_branch
      %8 = sbr.rel (0) target = $region5
    $region4: #{logistic_nn_forward.1} parent=1 // pred_region
      _
    $region5: #{logistic_nn_forward.1} parent=1 // pred_fallthru
      _
    %v9 = vld [vmem:[%s0] sm:$0x1]
    %v10 = vld [vmem:[%s0 + $0x1] sm:$0x1]
    %v11 = vld [vmem:[%s0 + $0x2] sm:$0x1]
    %v12 = vsub.f32 %v9, %v10
    %v13 = vmul.f32 %v12, %v11
    %v14 = vmul.f32 %v13, %v13
    %v15 = vsub.f32 1.0, %v14
    %v16 = vmul.f32 %v14, %v15
    %v17 = vlaneseq
    %v18 = vshrl.u32 %v17, 7
    %v19 = vadd.s32 %v18, 8
    %v20 = vadd.s32 %v18, 16
    %v21 = vadd.s32 %v18, 24
    %v22 = vlaneseq
    %v23 = vand.u32 %v22, 127
    %vm24 = vcmp.eq.s32.totalorder %v18, %v23
    %vm25 = vcmp.eq.s32.totalorder %v19, %v23
    %vm26 = vcmp.eq.s32.totalorder %v20, %v23
    %vm27 = vcmp.eq.s32.totalorder %v21, %v23
    %v28 = vperm.slane %v16, 0
    %v29 = vsel %vm24, %v28, 0.0
    %v30 = vsel %vm25, %v28, 0.0
    %v31 = vsel %vm26, %v28, 0.0
    %v32 = vsel %vm27, %v28, 0.0
    %vm33 = vcmask 261120
    %34 = vst.msk [vmem:[#allocation2] sm:$0xff] %vm33, %v29
    %35 = vst.msk [vmem:[#allocation2 + $0x8] sm:$0xff] %vm33, %v30
    %36 = vst.msk [vmem:[#allocation2 + $0x10] sm:$0xff] %vm33, %v31
    %37 = vst.msk [vmem:[#allocation2 + $0x18] sm:$0xff] %vm33, %v32
    // Predicated region
    $region6: #{logistic_nn_forward.1} parent=1 // pred_check
      _
    $region7: #{logistic_nn_forward.1} parent=1 // pred_check_branch
      %39 = sbr.rel (0) target = $region9
    $region8: #{logistic_nn_forward.1} parent=1 // pred_region
      %41 = vsyncadd [#allocation3], 0
      %s42 = sshll.u32 [#allocation2], 4
      %s43 = int_to_ptr.vmem [resolvable:$true] %s42
      %s44 = sshll.u32 %s1, 4
      %s45 = int_to_ptr.hbm [resolvable:$true] %s44
      %50 = dma.vmem_to_hbm [thread:$0]  %s43, 512, %s45, [#allocation3], 128, 128, 8
    $region9: #{logistic_nn_forward.1} parent=1 // pred_fallthru
      _
    // Predicated region
    $region10: #{logistic_nn_forward.1} parent=1 // pred_check
      _
    $region11: #{logistic_nn_forward.1} parent=1 // pred_check_branch
      %52 = sbr.rel (0) target = $region13
    $region12: #{logistic_nn_forward.1} parent=1 // pred_region
      %54 = dma.done [#allocation3], 512
    $region13: #{logistic_nn_forward.1} parent=1 // pred_fallthru
      _
    %55 = vsyncpa [#allocation3], 1

</llo_original>
